<compile_context>
chip_gen: v6e
topology: v6e:2x2x1
jax: 0.10.0
libtpu: 0.0.40
codegen_flags: <defaults>
</compile_context>

<pallas_src>
import jax
import jax.numpy as jnp
import numpy as np
from jax.experimental import pallas as pl
from jax.experimental.pallas import tpu as pltpu


def _round_up(x: int, m: int) -> int:
    return ((x + m - 1) // m) * m


def _patch_proj_kernel(x_ref, w_ref, b_ref, o_ref):
    """One (tm, N) output tile: o = x_tile @ W + b, single pass over K.

    x_ref: (tm, Kp) bf16 VMEM   patch rows (streamed)
    w_ref: (Kp, Np) bf16 VMEM   full projection weight (resident, index_map const)
    b_ref: (1,  Np) f32  VMEM   bias (resident)
    o_ref: (tm, Np) VMEM        output tile (caller dtype)
    """
    acc = jnp.dot(x_ref[...], w_ref[...], preferred_element_type=jnp.float32)
    o_ref[...] = (acc + b_ref[...]).astype(o_ref.dtype)


def _patch_projection(patches, w, b, *, out_dtype, tm=512):
    """patches: (M, K), w: (K, N), b: (1, N) f32  ->  (M, N) out_dtype."""
    M, K = patches.shape
    Kw, N = w.shape
    assert K == Kw, (K, Kw)

    Kp = _round_up(K, 128)          # K is one resident block (fits VMEM for PatchEmbed shapes)
    Np = _round_up(N, 128)          # N is one resident block (lane-dense stores)

    tm = min(tm, _round_up(M, 8))
    # Keep >= 2 M blocks when possible so v7x can shard the grid across its 2 TCs.
    if M > 8 and _round_up(M, tm) == tm:
        tm = _round_up((M + 1) // 2, 8)
    Mp = _round_up(M, tm)

    # Only materialize padding that is actually needed (K/N are usually already
    # 128-multiples for real PatchEmbed configs, so this is typically M-only or nothing).
    pad_m, pad_k, pad_n = Mp - M, Kp - K, Np - N
    if pad_m or pad_k:
        patches = jnp.pad(patches, ((0, pad_m), (0, pad_k)))
    if pad_k or pad_n:
        w = jnp.pad(w, ((0, pad_k), (0, pad_n)))
    if pad_n:
        b = jnp.pad(b, ((0, 0), (0, pad_n)))

    grid = (Mp // tm,)

    out = pl.pallas_call(
        _patch_proj_kernel,
        out_shape=jax.ShapeDtypeStruct((Mp, Np), out_dtype),
        grid=grid,
        in_specs=[
            pl.BlockSpec((tm, Kp), lambda i: (i, 0)),   # patch rows: streamed once
            pl.BlockSpec((Kp, Np), lambda i: (0, 0)),   # weight: resident (constant index)
            pl.BlockSpec((1, Np), lambda i: (0, 0)),    # bias: resident
        ],
        out_specs=pl.BlockSpec((tm, Np), lambda i: (i, 0)),
        compiler_params=pltpu.CompilerParams(
            dimension_semantics=("parallel",),
            vmem_limit_bytes=32 * 1024 * 1024,   # safe on v5e/v6e/v7x; bf16 tiles stay well under
        ),
    )(patches, w, b)

    if (Mp, Np) != (M, N):
        out = out[:M, :N]
    return out


class PatchEmbedPallas:
    """JAX/Pallas re-implementation of terratorch PatchEmbed.forward.

    Only norm_layer=None (nn.Identity) is supported.
    """

    def __init__(self, patch_size=16, num_frames=3, tubelet_size=1, in_chans=3,
                 embed_dim=768, norm_layer=None, flatten=True, bias=True, *,
                 compute_dtype=jnp.bfloat16, key=None):
        if norm_layer is not None:
            # TODO(synk): norm_layer (e.g. LayerNorm) is not implemented; Identity only.
            raise NotImplementedError("PatchEmbedPallas supports norm_layer=None only")
        patch_size = ((patch_size, patch_size)
                      if isinstance(patch_size, int) else tuple(patch_size))
        self.patch_size = patch_size
        self.tubelet_size = tubelet_size
        self.num_frames = num_frames
        if num_frames % tubelet_size != 0:
            msg = (f"num_frames ({num_frames} must be divisible by tubelet size "
                   f"({tubelet_size}))")
            raise Exception(msg)
        self.effective_time_dim = num_frames // tubelet_size
        self.in_chans = in_chans
        self.embed_dim = embed_dim
        self.flatten = flatten
        self.compute_dtype = compute_dtype

        if key is None:
            key = jax.random.PRNGKey(0)
        wkey, bkey = jax.random.split(key)
        fan_in = in_chans * tubelet_size * patch_size[0] * patch_size[1]
        bound = 1.0 / np.sqrt(fan_in)
        # Conv3d weight layout: (embed_dim, in_chans, tubelet, ph, pw)  (PyTorch default init).
        self.weight = jax.random.uniform(
            wkey, (embed_dim, in_chans, tubelet_size, patch_size[0], patch_size[1]),
            dtype=jnp.float32, minval=-bound, maxval=bound)
        if bias:
            self.bias = jax.random.uniform(
                bkey, (embed_dim,), dtype=jnp.float32, minval=-bound, maxval=bound)
        else:
            self.bias = jnp.zeros((embed_dim,), dtype=jnp.float32)

    def __call__(self, x):
        # (B, C, H, W) with num_frames == 1 -> (B, C, 1, H, W), as in the PyTorch forward.
        if x.ndim == 4 and self.num_frames == 1:
            x = x.reshape(-1, self.in_chans, self.num_frames, *x.shape[-2:])
        B, C, T, H, W = x.shape
        ts = self.tubelet_size
        ph, pw = self.patch_size
        Tt, Hh, Ww = T // ts, H // ph, W // pw
        out_dtype = x.dtype

        # Patch extraction in the (narrow) compute dtype — halves the HBM round
        # trip of the transpose compared to doing it in f32.
        # TODO(synk): fully fusing the (C, ts, ph, pw) gather into the kernel via a
        # per-row BlockSpec is possible but the tiny per-row M hurts MXU utilization.
        x = x.astype(self.compute_dtype)
        # Non-overlapping patches, inner order matching Conv3d weight flatten (C, ts, ph, pw).
        xp = x.reshape(B, C, Tt, ts, Hh, ph, Ww, pw)
        xp = xp.transpose(0, 2, 4, 6, 1, 3, 5, 7)                   # (B, Tt, Hh, Ww, C, ts, ph, pw)
        patches = xp.reshape(B * Tt * Hh * Ww, C * ts * ph * pw)    # (M, K)

        w = self.weight.reshape(self.embed_dim, -1).T.astype(self.compute_dtype)  # (K, N)
        b = self.bias.astype(jnp.float32).reshape(1, -1)                           # (1, N) f32

        out = _patch_projection(patches, w, b, out_dtype=out_dtype)  # (M, N)
        out = out.reshape(B, Tt * Hh * Ww, self.embed_dim)           # == flatten(2).transpose(1, 2)
        if not self.flatten:
            # Conv output layout (B, embed_dim, Tt, Hh, Ww).
            out = out.reshape(B, Tt, Hh, Ww, self.embed_dim).transpose(0, 4, 1, 2, 3)
        return out


def _reference_patch_embed(x5d, weight, bias, patch_size, tubelet_size, flatten=True):
    """Independent reference: real 3D convolution via lax.conv_general_dilated (f32)."""
    y = jax.lax.conv_general_dilated(
        x5d, weight,
        window_strides=(tubelet_size, patch_size[0], patch_size[1]),
        padding="VALID",
        dimension_numbers=("NCDHW", "OIDHW", "NCDHW"),
        precision=jax.lax.Precision.HIGHEST,
    )
    y = y + bias.reshape(1, -1, 1, 1, 1)
    if flatten:
        B, E = y.shape[:2]
        y = y.reshape(B, E, -1).transpose(0, 2, 1)
    return y


if __name__ == "__main__":
    # Small shapes consistent with PatchEmbed: B=2, C=4, H=W=16, patch=8,
    # num_frames=1 (exercises the 4D-input reshape path), embed_dim=32.
    key = jax.random.PRNGKey(0)
    xkey, pkey = jax.random.split(key)
    B, C, H, W = 2, 4, 16, 16
    x = jax.random.normal(xkey, (B, C, H, W), dtype=jnp.float32)

    embed = PatchEmbedPallas(patch_size=8, num_frames=1, tubelet_size=1,
                             in_chans=C, embed_dim=32, flatten=True, bias=True,
                             key=pkey)
    out = jax.block_until_ready(embed(x))

    x5d = x.reshape(B, C, 1, H, W)
    ref = jax.block_until_ready(
        _reference_patch_embed(x5d, embed.weight, embed.bias,
                               embed.patch_size, embed.tubelet_size, flatten=True))

    n_tokens = (H // 8) * (W // 8)
    assert out.shape == (B, n_tokens, 32), out.shape
    assert out.dtype == x.dtype, out.dtype
    # bf16 MXU datapath with f32 accumulate -> widened tolerance vs the f32 conv reference.
    np.testing.assert_allclose(np.asarray(out, dtype=np.float32), np.asarray(ref),
                               rtol=2e-2, atol=2e-2)

    print("KERNEL_OK")
</pallas_src>

<mosaic_0001>
module attributes {stable_mosaic.version = 11 : i64} {
  func.func @_patch_proj_kernel(%arg0: i32, %arg1: memref<8x256xbf16, #tpu.memory_space<vmem>>, %arg2: memref<256x128xbf16, #tpu.memory_space<vmem>>, %arg3: memref<1x128xf32, #tpu.memory_space<vmem>>, %arg4: memref<8x128xf32, #tpu.memory_space<vmem>>) attributes {dimension_semantics = [#tpu.dimension_semantics<parallel>], iteration_bounds = array<i64: 1>, scalar_prefetch = 0 : i64, scratch_operands = 0 : i64, tpu.core_type = #tpu.core_type<tc>, window_params = [{transform_indices = @transform_0, window_bounds = array<i64: 8, 256>}, {pipeline_mode = #tpu.pipeline_mode<synchronous>, transform_indices = @transform_1, window_bounds = array<i64: 256, 128>}, {pipeline_mode = #tpu.pipeline_mode<synchronous>, transform_indices = @transform_2, window_bounds = array<i64: 1, 128>}, {transform_indices = @transform_3, window_bounds = array<i64: 8, 128>}]} {
    %c0 = arith.constant 0 : index
    %c0_0 = arith.constant 0 : index
    %0 = vector.load %arg1[%c0, %c0_0] : memref<8x256xbf16, #tpu.memory_space<vmem>>, vector<8x256xbf16>
    %c0_1 = arith.constant 0 : index
    %c0_2 = arith.constant 0 : index
    %1 = vector.load %arg2[%c0_1, %c0_2] : memref<256x128xbf16, #tpu.memory_space<vmem>>, vector<256x128xbf16>
    %cst = arith.constant dense<0.000000e+00> : vector<8x128xf32>
    %2 = tpu.matmul %0, %1, %cst {dimension_numbers = #tpu.dot_dimension_numbers<[1], [0], [0], [1], [0, 0, 1, 1], [], []>} : vector<8x256xbf16>, vector<256x128xbf16>, vector<8x128xf32> -> vector<8x128xf32>
    %c0_3 = arith.constant 0 : index
    %c0_4 = arith.constant 0 : index
    %3 = vector.load %arg3[%c0_3, %c0_4] : memref<1x128xf32, #tpu.memory_space<vmem>>, vector<1x128xf32>
    %4 = vector.broadcast %3 : vector<1x128xf32> to vector<8x128xf32>
    %5 = arith.addf %2, %4 : vector<8x128xf32>
    %c0_5 = arith.constant 0 : index
    %c0_6 = arith.constant 0 : index
    %6 = vector.load %arg4[%c0_5, %c0_6] : memref<8x128xf32, #tpu.memory_space<vmem>>, vector<8x128xf32>
    tpu.vector_store %arg4[%c0_5, %c0_6], %5 {strides = array<i32>} : memref<8x128xf32, #tpu.memory_space<vmem>>, vector<8x128xf32>,
    return
  }
  func.func @transform_0(%arg0: i32) -> (i32, i32) {
    %c0_i32 = arith.constant 0 : i32
    %c0_i32_0 = arith.constant 0 : i32
    return %arg0, %c0_i32 : i32, i32
  }
  func.func @transform_1(%arg0: i32) -> (i32, i32) {
    %c0_i32 = arith.constant 0 : i32
    %c0_i32_0 = arith.constant 0 : i32
    %c0_i32_1 = arith.constant 0 : i32
    return %c0_i32, %c0_i32_0 : i32, i32
  }
  func.func @transform_2(%arg0: i32) -> (i32, i32) {
    %c0_i32 = arith.constant 0 : i32
    %c0_i32_0 = arith.constant 0 : i32
    %c0_i32_1 = arith.constant 0 : i32
    return %c0_i32, %c0_i32_0 : i32, i32
  }
  func.func @transform_3(%arg0: i32) -> (i32, i32) {
    %c0_i32 = arith.constant 0 : i32
    %c0_i32_0 = arith.constant 0 : i32
    return %arg0, %c0_i32 : i32, i32
  }
}

</mosaic_0001>

<llo_original>
// kernel: tpu_custom_call.1
$region0: #{tpu_custom_call.1}
  #allocation0 [shape = 'u32[]', space=smem, size = 0x4, offset = 0x4, fixed_abs, tag = 'smem constant byte address 0x4 - core index']
  #allocation1 [shape = 'u32[144,128]{1,0:T(1,128)}', space=vmem, size = 0x12000, scoped, tag = 'internal scratch']
  %s0 = inlined_call_operand.hbm [shape: bf16[8,256], index: 0, kind: input, shape index: {}]
  %s1 = inlined_call_operand.hbm [shape: bf16[256,128], index: 1, kind: input, shape index: {}]
  %s2 = inlined_call_operand.vmem [shape: f32[1,128], index: 2, kind: input, shape index: {}]
  %s3 = inlined_call_operand.hbm [shape: f32[8,128], index: 3, kind: output, shape index: {}]
  %s4 = sld [smem:[#allocation0]]
  $region30: #{tpu_custom_call.1} parent=0
    _
  %s6 = ssub.s32 1, %s4
  %s7 = scalar_select 0, %s6, %s4
  $region1: #{tpu_custom_call.1} parent=0
    #allocation2 [shape = 'u8[4096]{0}', space=vmem, size = 0x1000, scoped, tag = 'input window, operand 0, single buffered']
    #allocation3 [shape = 's32[1]{0}', space=sflag, size = 0x4, scoped, tag = 'scoped memory for tpu_custom_call.1']
    #allocation4 [shape = 's32[1]{0}', space=sflag, size = 0x4, scoped, tag = 'scoped memory for tpu_custom_call.1']
    #allocation5 [shape = 'u8[65536]{0}', space=vmem, size = 0x10000, scoped, tag = 'input window, operand 1, single buffered']
    #allocation6 [shape = 's32[1]{0}', space=sflag, size = 0x4, scoped, tag = 'scoped memory for tpu_custom_call.1']
    #allocation7 [shape = 'u8[4096]{0}', space=vmem, size = 0x1000, scoped, tag = 'output window, operand 0, single buffered']
    %8 = vsyncpa [#allocation3], 0
    %9 = vsyncpa [#allocation6], 0
    %10 = vsyncpa [#allocation4], 0
    // Predicated region
    $region2: #{tpu_custom_call.1} parent=1 // pred_check
      _
    $region3: #{tpu_custom_call.1} parent=1 // pred_check_branch
      %12 = sbr.rel (0) target = $region5
    $region4: #{tpu_custom_call.1} parent=1 // pred_region
      %s14 = ssub.s32 128, 128
      %15 = vsyncadd [#allocation3], %s14
      %s17 = sshll.u32 [#allocation2], 4
      %s18 = int_to_ptr.vmem [resolvable:$true] %s17
      %20 = dma.hbm_to_vmem [thread:$0]  %s0, 128, %s18, [#allocation3]
    $region5: #{tpu_custom_call.1} parent=1 // pred_fallthru
      _
    // Predicated region
    $region6: #{tpu_custom_call.1} parent=1 // pred_check
      _
    $region7: #{tpu_custom_call.1} parent=1 // pred_check_branch
      %22 = sbr.rel (0) target = $region9
    $region8: #{tpu_custom_call.1} parent=1 // pred_region
      %s24 = ssub.s32 2048, 2048
      %25 = vsyncadd [#allocation6], %s24
      %s26 = sshll.u32 [#allocation5], 4
      %s27 = int_to_ptr.vmem [resolvable:$true] %s26
      %32 = dma.hbm_to_vmem [thread:$0]  %s1, 2048, %s27, [#allocation6], 64, 64, 4
    $region9: #{tpu_custom_call.1} parent=1 // pred_fallthru
      _
    // Predicated region
    $region10: #{tpu_custom_call.1} parent=1 // pred_check
      _
    $region11: #{tpu_custom_call.1} parent=1 // pred_check_branch
      %34 = sbr.rel (0) target = $region13
    $region12: #{tpu_custom_call.1} parent=1 // pred_region
      _
    $region13: #{tpu_custom_call.1} parent=1 // pred_fallthru
      _
    // Predicated region
    $region14: #{tpu_custom_call.1} parent=1 // pred_check
      _
    $region15: #{tpu_custom_call.1} parent=1 // pred_check_branch
      %36 = sbr.rel (0) target = $region17
    $region16: #{tpu_custom_call.1} parent=1 // pred_region
      %37 = dma.done [#allocation3], 128
    $region17: #{tpu_custom_call.1} parent=1 // pred_fallthru
      _
    // Predicated region
    $region18: #{tpu_custom_call.1} parent=1 // pred_check
      _
    $region19: #{tpu_custom_call.1} parent=1 // pred_check_branch
      %39 = sbr.rel (0) target = $region21
    $region20: #{tpu_custom_call.1} parent=1 // pred_region
      %40 = dma.done [#allocation6], 2048
    $region21: #{tpu_custom_call.1} parent=1 // pred_fallthru
      _
    %v42 = vld [vmem:[#allocation2] sm:$0xff]
    %v43 = vld [vmem:[#allocation5] sm:$0xf]
    %v44 = vld [vmem:[#allocation5 + $0x4] sm:$0xf]
    %v45 = vld [vmem:[#allocation5 + $0x8] sm:$0xf]
    %v46 = vld [vmem:[#allocation5 + $0xc] sm:$0xf]
    %v47 = vld [vmem:[#allocation5 + $0x10] sm:$0xf]
    %v48 = vld [vmem:[#allocation5 + $0x14] sm:$0xf]
    %v49 = vld [vmem:[#allocation5 + $0x18] sm:$0xf]
    %v50 = vld [vmem:[#allocation5 + $0x1c] sm:$0xf]
    %v51 = vld [vmem:[#allocation5 + $0x20] sm:$0xf]
    %v52 = vld [vmem:[#allocation5 + $0x24] sm:$0xf]
    %v53 = vld [vmem:[#allocation5 + $0x28] sm:$0xf]
    %v54 = vld [vmem:[#allocation5 + $0x2c] sm:$0xf]
    %v55 = vld [vmem:[#allocation5 + $0x30] sm:$0xf]
    %v56 = vld [vmem:[#allocation5 + $0x34] sm:$0xf]
    %v57 = vld [vmem:[#allocation5 + $0x38] sm:$0xf]
    %v58 = vld [vmem:[#allocation5 + $0x3c] sm:$0xf]
    %v59 = vld [vmem:[#allocation5 + $0x40] sm:$0xf]
    %v60 = vld [vmem:[#allocation5 + $0x44] sm:$0xf]
    %v61 = vld [vmem:[#allocation5 + $0x48] sm:$0xf]
    %v62 = vld [vmem:[#allocation5 + $0x4c] sm:$0xf]
    %v63 = vld [vmem:[#allocation5 + $0x50] sm:$0xf]
    %v64 = vld [vmem:[#allocation5 + $0x54] sm:$0xf]
    %v65 = vld [vmem:[#allocation5 + $0x58] sm:$0xf]
    %v66 = vld [vmem:[#allocation5 + $0x5c] sm:$0xf]
    %v67 = vld [vmem:[#allocation5 + $0x60] sm:$0xf]
    %v68 = vld [vmem:[#allocation5 + $0x64] sm:$0xf]
    %v69 = vld [vmem:[#allocation5 + $0x68] sm:$0xf]
    %v70 = vld [vmem:[#allocation5 + $0x6c] sm:$0xf]
    %v71 = vld [vmem:[#allocation5 + $0x70] sm:$0xf]
    %v72 = vld [vmem:[#allocation5 + $0x74] sm:$0xf]
    %v73 = vld [vmem:[#allocation5 + $0x78] sm:$0xf]
    %v74 = vld [vmem:[#allocation5 + $0x7c] sm:$0xf]
    %v75 = vld [vmem:[%s2] sm:$0x1]
    %v77 = vlaneseq
    %v78 = vshrl.u32 %v77, 7
    %v79 = vsub.s32 0, %v78
    %v80 = vrot.slane %v75, %v79
    %v83 = vunpack.c.l.b16 %v42
    %v84 = vunpack.c.h.b16 %v42
    %v85 = vpack.c.b16 %v83, %v83
    %v86 = vpack.c.b16 %v84, %v84
    %v121 = vunpack.c.l.b16 %v43
    %v122 = vunpack.c.l.b16 %v44
    %v123 = vunpack.c.l.b16 %v45
    %v124 = vunpack.c.l.b16 %v46
    %v125 = vunpack.c.l.b16 %v47
    %v126 = vunpack.c.l.b16 %v48
    %v127 = vunpack.c.l.b16 %v49
    %v128 = vunpack.c.l.b16 %v50
    %v129 = vunpack.c.l.b16 %v51
    %v130 = vunpack.c.l.b16 %v52
    %v131 = vunpack.c.l.b16 %v53
    %v132 = vunpack.c.l.b16 %v54
    %v133 = vunpack.c.l.b16 %v55
    %v134 = vunpack.c.l.b16 %v56
    %v135 = vunpack.c.l.b16 %v57
    %v136 = vunpack.c.l.b16 %v58
    %v137 = vunpack.c.l.b16 %v59
    %v138 = vunpack.c.l.b16 %v60
    %v139 = vunpack.c.l.b16 %v61
    %v140 = vunpack.c.l.b16 %v62
    %v141 = vunpack.c.l.b16 %v63
    %v142 = vunpack.c.l.b16 %v64
    %v143 = vunpack.c.l.b16 %v65
    %v144 = vunpack.c.l.b16 %v66
    %v145 = vunpack.c.l.b16 %v67
    %v146 = vunpack.c.l.b16 %v68
    %v147 = vunpack.c.l.b16 %v69
    %v148 = vunpack.c.l.b16 %v70
    %v149 = vunpack.c.l.b16 %v71
    %v150 = vunpack.c.l.b16 %v72
    %v151 = vunpack.c.l.b16 %v73
    %v152 = vunpack.c.l.b16 %v74
    %v153 = vpack.c.b16 %v122, %v121
    %v154 = vpack.c.b16 %v124, %v123
    %v155 = vpack.c.b16 %v126, %v125
    %v156 = vpack.c.b16 %v128, %v127
    %v157 = vpack.c.b16 %v130, %v129
    %v158 = vpack.c.b16 %v132, %v131
    %v159 = vpack.c.b16 %v134, %v133
    %v160 = vpack.c.b16 %v136, %v135
    %v161 = vpack.c.b16 %v138, %v137
    %v162 = vpack.c.b16 %v140, %v139
    %v163 = vpack.c.b16 %v142, %v141
    %v164 = vpack.c.b16 %v144, %v143
    %v165 = vpack.c.b16 %v146, %v145
    %v166 = vpack.c.b16 %v148, %v147
    %v167 = vpack.c.b16 %v150, %v149
    %v168 = vpack.c.b16 %v152, %v151
    %185 = vmatprep.subr.bf16.mxu0 0
    %186 = vmatpush1.bf16.msra.mxu0 %v160
    %187 = vmatprep.subr.bf16.mxu0 0
    %188 = vmatpush1.bf16.msra.mxu0 %v159
    %189 = vmatprep.subr.bf16.mxu0 0
    %190 = vmatpush1.bf16.msra.mxu0 %v158
    %191 = vmatprep.subr.bf16.mxu0 0
    %192 = vmatpush1.bf16.msra.mxu0 %v157
    %193 = vmatprep.subr.bf16.mxu0 0
    %194 = vmatpush1.bf16.msra.mxu0 %v156
    %195 = vmatprep.subr.bf16.mxu0 0
    %196 = vmatpush1.bf16.msra.mxu0 %v155
    %197 = vmatprep.subr.bf16.mxu0 0
    %198 = vmatpush1.bf16.msra.mxu0 %v154
    %199 = vmatprep.subr.bf16.mxu0 0
    %200 = vmatpush1.bf16.msra.mxu0 %v153
    %201 = vmatprep.subr.bf16.mxu0 0
    %202 = vmatpush2.bf16.msra.mxu0 %v168
    %203 = vmatprep.subr.bf16.mxu0 0
    %204 = vmatpush2.bf16.msra.mxu0 %v167
    %205 = vmatprep.subr.bf16.mxu0 0
    %206 = vmatpush2.bf16.msra.mxu0 %v166
    %207 = vmatprep.subr.bf16.mxu0 0
    %208 = vmatpush2.bf16.msra.mxu0 %v165
    %209 = vmatprep.subr.bf16.mxu0 0
    %210 = vmatpush2.bf16.msra.mxu0 %v164
    %211 = vmatprep.subr.bf16.mxu0 0
    %212 = vmatpush2.bf16.msra.mxu0 %v163
    %213 = vmatprep.subr.bf16.mxu0 0
    %214 = vmatpush2.bf16.msra.mxu0 %v162
    %215 = vmatprep.subr.bf16.mxu0 0
    %216 = vmatpush2.bf16.msra.mxu0 %v161
    %217 = vmatprep.mubr.bf16.mxu0 %v86
    %218 = vmatmul.mubr.bf16.gmra.mxu0 %v85
    %v219 = vpop.f32.mrf.mxu0
    %v220 = vadd.f32 %v80, %v219
    %v221 = vpop.f32.mrf.mxu0
    %v222 = vpop.f32.mrf.mxu0
    %v223 = vpop.f32.mrf.mxu0
    %224 = vdwg.mxu0
    %225 = vst [vmem:[#allocation7] sm:$0xff] %v220
    // Predicated region
    $region22: #{tpu_custom_call.1} parent=1 // pred_check
      _
    $region23: #{tpu_custom_call.1} parent=1 // pred_check_branch
      %227 = sbr.rel (0) target = $region25
    $region24: #{tpu_custom_call.1} parent=1 // pred_region
      %s229 = ssub.s32 128, 128
      %230 = vsyncadd [#allocation4], %s229
      %s232 = sshll.u32 [#allocation7], 4
      %s233 = int_to_ptr.vmem [resolvable:$true] %s232
      %235 = dma.vmem_to_hbm [thread:$0]  %s233, 128, %s3, [#allocation4]
    $region25: #{tpu_custom_call.1} parent=1 // pred_fallthru
      _
    // Predicated region
    $region26: #{tpu_custom_call.1} parent=1 // pred_check
      _
    $region27: #{tpu_custom_call.1} parent=1 // pred_check_branch
      %237 = sbr.rel (0) target = $region29
    $region28: #{tpu_custom_call.1} parent=1 // pred_region
      %238 = dma.done [#allocation4], 128
    $region29: #{tpu_custom_call.1} parent=1 // pred_fallthru
      _
    %239 = vsyncpa [#allocation3], 1
    %240 = vsyncpa [#allocation6], 1
    %241 = vsyncpa [#allocation4], 1

</llo_original>
